<compile_context>
chip_gen: v7x
topology: tpu7x:2x2x1
jax: 0.10.0
libtpu: 0.0.40
codegen_flags: <defaults>
</compile_context>

<pallas_src>
import functools

import numpy as np
import jax
import jax.numpy as jnp
from jax.experimental import pallas as pl
from jax.experimental.pallas import tpu as pltpu


def _area_resize_weights(src: int, dst: int) -> np.ndarray:
    """Row-stochastic (dst, src) matrix implementing cv2 INTER_AREA downscale."""
    assert src >= dst, "INTER_AREA weights implemented for downscale only"
    scale = src / dst
    w = np.zeros((dst, src), dtype=np.float32)
    for i in range(dst):
        lo = i * scale
        hi = (i + 1) * scale
        j0 = int(np.floor(lo))
        j1 = min(int(np.ceil(hi)), src)
        for j in range(j0, j1):
            overlap = min(hi, j + 1) - max(lo, j)
            if overlap > 0:
                w[i, j] = overlap / scale
    return w


def _cv2_transforms_kernel(img_ref, wc_ref, wr_ref, out_ref, *, h_valid, row_tile):
    # img_ref: (row_tile, W*3)   current row tile of the HWC image (flattened)
    # wc_ref : (W*3, S)          crop + RGB2GRAY + column-resize weights
    # wr_ref : (S, row_tile)     crop + row-resize weights for this tile
    # out_ref: (S, S)            resident accumulator across the row-tile grid
    k = pl.program_id(0)

    @pl.when(k == 0)
    def _():
        out_ref[...] = jnp.zeros_like(out_ref)

    x = img_ref[...].astype(jnp.float32)                                  # (T, W*3)
    tmp = jnp.dot(x, wc_ref[...], preferred_element_type=jnp.float32)     # (T, S)

    # Zero rows past the true image height (partial edge tile reads
    # unspecified VMEM data; mask on the small (T, S) tensor, not the image).
    row_ids = k * row_tile + jax.lax.broadcasted_iota(jnp.int32, tmp.shape, 0)
    tmp = jnp.where(row_ids < h_valid, tmp, 0.0)

    out_ref[...] += jnp.dot(wr_ref[...], tmp, preferred_element_type=jnp.float32)


def cv2_transforms(img_hwc: jax.Array, img_size: int, margin: int = 20,
                   row_tile: int = 256) -> jax.Array:
    """JAX/Pallas equivalent of cv_2_transforms(img_size, margin).forward(img)."""
    H, W, C = img_hwc.shape
    assert C == 3, "expected an RGB image (H, W, 3)"
    ch = H - 2 * margin
    cw = W - 2 * margin
    assert ch >= img_size and cw >= img_size, "INTER_AREA downscale only"

    S = img_size
    w3 = W * 3

    # --- pick the row tile -------------------------------------------------
    if H <= row_tile:
        th = H                      # single full-extent tile (always legal)
        nb = 1
    else:
        th = (row_tile // 128) * 128 or 128   # multiple of 128 -> legal Wr block
        nb = -(-H // th)                      # cdiv
    hp = nb * th                    # padded row extent baked into Wr_full

    # --- host-precomputed weights (crop + gray mix + transpose folded in) ---
    wr_core = _area_resize_weights(ch, S)          # (S, ch)
    wc_core = _area_resize_weights(cw, S)          # (S, cw)
    coeffs = np.array([0.299, 0.587, 0.114], dtype=np.float32)   # cv2 RGB2GRAY

    wr_full = np.zeros((S, hp), dtype=np.float32)
    wr_full[:, margin:margin + ch] = wr_core

    wc_full = np.zeros((w3, S), dtype=np.float32)
    for c in range(3):
        wc_full[3 * margin + c: 3 * (margin + cw) + c: 3, :] = coeffs[c] * wc_core.T

    # Native HWC layout, viewed as (H, W*3) -- contiguous, no transpose/copy.
    img2d = img_hwc.reshape(H, w3)

    kernel = functools.partial(_cv2_transforms_kernel, h_valid=H, row_tile=th)
    return pl.pallas_call(
        kernel,
        out_shape=jax.ShapeDtypeStruct((S, S), jnp.float32),
        grid=(nb,),
        in_specs=[
            pl.BlockSpec((th, w3), lambda k: (k, 0)),   # image row tile
            pl.BlockSpec((w3, S), lambda k: (0, 0)),    # column weights (resident)
            pl.BlockSpec((S, th), lambda k: (0, k)),    # row weights for this tile
        ],
        out_specs=pl.BlockSpec((S, S), lambda k: (0, 0)),
        compiler_params=pltpu.CompilerParams(
            dimension_semantics=("arbitrary",)),        # row axis is a reduction
    )(img2d, jnp.asarray(wc_full), jnp.asarray(wr_full))


def _reference(img_hwc, img_size, margin):
    # Pure numpy reference of the same math (gray -> crop -> area average).
    img = np.asarray(img_hwc, dtype=np.float32)
    gray = 0.299 * img[..., 0] + 0.587 * img[..., 1] + 0.114 * img[..., 2]
    crop = gray[margin:gray.shape[0] - margin, margin:gray.shape[1] - margin]
    wr = _area_resize_weights(crop.shape[0], img_size)
    wc = _area_resize_weights(crop.shape[1], img_size)
    return wr @ crop @ wc.T


if __name__ == "__main__":
    key = jax.random.PRNGKey(0)
    k1, k2 = jax.random.split(key)

    # Test 1: small cv2-style image, single row tile.
    #   72x72x3, margin=20 -> 32x32 crop -> 16x16 output.
    img1 = jax.random.uniform(k1, (72, 72, 3), dtype=jnp.float32)
    out1 = jax.block_until_ready(cv2_transforms(img1, img_size=16, margin=20))
    assert out1.shape == (16, 16)
    np.testing.assert_allclose(np.asarray(out1), _reference(np.asarray(img1), 16, 20),
                               rtol=1e-4, atol=1e-4)

    # Test 2: taller image forcing the multi-tile reduction grid (row_tile=128,
    #   grid=3, partial last tile exercised + masked).
    img2 = jax.random.uniform(k2, (300, 200, 3), dtype=jnp.float32)
    out2 = jax.block_until_ready(
        cv2_transforms(img2, img_size=32, margin=20, row_tile=128))
    assert out2.shape == (32, 32)
    np.testing.assert_allclose(np.asarray(out2), _reference(np.asarray(img2), 32, 20),
                               rtol=1e-4, atol=1e-4)

    print("KERNEL_OK")
</pallas_src>

<mosaic_0001>
module attributes {stable_mosaic.version = 11 : i64} {
  func.func @_cv2_transforms_kernel(%arg0: i32, %arg1: memref<72x216xf32, #tpu.memory_space<vmem>>, %arg2: memref<216x16xf32, #tpu.memory_space<vmem>>, %arg3: memref<16x72xf32, #tpu.memory_space<vmem>>, %arg4: memref<16x16xf32, #tpu.memory_space<vmem>>) attributes {dimension_semantics = [#tpu.dimension_semantics<arbitrary>], iteration_bounds = array<i64: 1>, scalar_prefetch = 0 : i64, scratch_operands = 0 : i64, tpu.core_type = #tpu.core_type<tc>, window_params = [{transform_indices = @transform_0, window_bounds = array<i64: 72, 216>}, {pipeline_mode = #tpu.pipeline_mode<synchronous>, transform_indices = @transform_1, window_bounds = array<i64: 216, 16>}, {transform_indices = @transform_2, window_bounds = array<i64: 16, 72>}, {pipeline_mode = #tpu.pipeline_mode<synchronous>, transform_indices = @transform_3, window_bounds = array<i64: 16, 16>}]} {
    %c0_i32 = arith.constant 0 : i32
    %0 = arith.cmpi eq, %arg0, %c0_i32 : i32
    %1 = arith.extui %0 : i1 to i32
    %c0_i32_0 = arith.constant 0 : i32
    %2 = arith.cmpi ne, %1, %c0_i32_0 : i32
    scf.if %2 {
      %cst_13 = arith.constant 0.000000e+00 : f32
      %19 = vector.broadcast %cst_13 : f32 to vector<16x16xf32>
      %c0_14 = arith.constant 0 : index
      %c0_15 = arith.constant 0 : index
      %20 = vector.load %arg4[%c0_14, %c0_15] : memref<16x16xf32, #tpu.memory_space<vmem>>, vector<16x16xf32>
      tpu.vector_store %arg4[%c0_14, %c0_15], %19 {strides = array<i32>} : memref<16x16xf32, #tpu.memory_space<vmem>>, vector<16x16xf32>,
    } else {
    }
    %c0 = arith.constant 0 : index
    %c0_1 = arith.constant 0 : index
    %3 = vector.load %arg1[%c0, %c0_1] : memref<72x216xf32, #tpu.memory_space<vmem>>, vector<72x216xf32>
    %c0_2 = arith.constant 0 : index
    %c0_3 = arith.constant 0 : index
    %4 = vector.load %arg2[%c0_2, %c0_3] : memref<216x16xf32, #tpu.memory_space<vmem>>, vector<216x16xf32>
    %cst = arith.constant dense<0.000000e+00> : vector<72x16xf32>
    %5 = tpu.matmul %3, %4, %cst {dimension_numbers = #tpu.dot_dimension_numbers<[1], [0], [0], [1], [0, 0, 1, 1], [], []>} : vector<72x216xf32>, vector<216x16xf32>, vector<72x16xf32> -> vector<72x16xf32>
    %c72_i32 = arith.constant 72 : i32
    %6 = arith.muli %arg0, %c72_i32 : i32
    %7 = tpu.iota {dimensions = array<i32: 0>} : vector<72x16xi32>
    %8 = vector.broadcast %6 : i32 to vector<72x16xi32>
    %9 = arith.addi %8, %7 : vector<72x16xi32>
    %c72_i32_4 = arith.constant 72 : i32
    %10 = vector.broadcast %c72_i32_4 : i32 to vector<72x16xi32>
    %11 = arith.cmpi slt, %9, %10 : vector<72x16xi32>
    %cst_5 = arith.constant 0.000000e+00 : f32
    %12 = vector.broadcast %cst_5 : f32 to vector<72x16xf32>
    %13 = arith.select %11, %5, %12 : vector<72x16xi1>, vector<72x16xf32>
    %c0_6 = arith.constant 0 : index
    %c0_7 = arith.constant 0 : index
    %14 = vector.load %arg4[%c0_6, %c0_7] : memref<16x16xf32, #tpu.memory_space<vmem>>, vector<16x16xf32>
    %c0_8 = arith.constant 0 : index
    %c0_9 = arith.constant 0 : index
    %15 = vector.load %arg3[%c0_8, %c0_9] : memref<16x72xf32, #tpu.memory_space<vmem>>, vector<16x72xf32>
    %cst_10 = arith.constant dense<0.000000e+00> : vector<16x16xf32>
    %16 = tpu.matmul %15, %13, %cst_10 {dimension_numbers = #tpu.dot_dimension_numbers<[1], [0], [0], [1], [0, 0, 1, 1], [], []>} : vector<16x72xf32>, vector<72x16xf32>, vector<16x16xf32> -> vector<16x16xf32>
    %17 = arith.addf %14, %16 : vector<16x16xf32>
    %c0_11 = arith.constant 0 : index
    %c0_12 = arith.constant 0 : index
    %18 = vector.load %arg4[%c0_11, %c0_12] : memref<16x16xf32, #tpu.memory_space<vmem>>, vector<16x16xf32>
    tpu.vector_store %arg4[%c0_11, %c0_12], %17 {strides = array<i32>} : memref<16x16xf32, #tpu.memory_space<vmem>>, vector<16x16xf32>,
    return
  }
  func.func @transform_0(%arg0: i32) -> (i32, i32) {
    %c0_i32 = arith.constant 0 : i32
    %c0_i32_0 = arith.constant 0 : i32
    return %arg0, %c0_i32 : i32, i32
  }
  func.func @transform_1(%arg0: i32) -> (i32, i32) {
    %c0_i32 = arith.constant 0 : i32
    %c0_i32_0 = arith.constant 0 : i32
    %c0_i32_1 = arith.constant 0 : i32
    return %c0_i32, %c0_i32_0 : i32, i32
  }
  func.func @transform_2(%arg0: i32) -> (i32, i32) {
    %c0_i32 = arith.constant 0 : i32
    %c0_i32_0 = arith.constant 0 : i32
    return %c0_i32, %arg0 : i32, i32
  }
  func.func @transform_3(%arg0: i32) -> (i32, i32) {
    %c0_i32 = arith.constant 0 : i32
    %c0_i32_0 = arith.constant 0 : i32
    %c0_i32_1 = arith.constant 0 : i32
    return %c0_i32, %c0_i32_0 : i32, i32
  }
}

</mosaic_0001>

<llo_original>
// kernel: tpu_custom_call.1
$region0: #{tpu_custom_call.1}
  #allocation0 [shape = 'u32[]', space=smem, size = 0x4, offset = 0x4, fixed_abs, tag = 'smem constant byte address 0x4 - core index']
  #allocation1 [shape = 'u32[144,128]{1,0:T(1,128)}', space=vmem, size = 0x12000, scoped, tag = 'internal scratch']
  %s0 = inlined_call_operand.vmem [shape: f32[72,216], index: 0, kind: input, shape index: {}]
  %s1 = inlined_call_operand.vmem [shape: f32[216,16], index: 1, kind: input, shape index: {}]
  %s2 = inlined_call_operand.vmem [shape: f32[16,72], index: 2, kind: input, shape index: {}]
  %s3 = inlined_call_operand.hbm [shape: f32[16,16], index: 3, kind: output, shape index: {}]
  %s4 = sld [smem:[#allocation0]]
  $region26: #{tpu_custom_call.1} parent=0
    _
  %s6 = ssub.s32 1, %s4
  %s7 = scalar_select 0, %s6, %s4
  $region1: #{tpu_custom_call.1} parent=0
    #allocation2 [shape = 'u8[8192]{0}', space=vmem, size = 0x2000, scoped, tag = 'output window, operand 0, single buffered']
    #allocation3 [shape = 's32[1]{0}', space=sflag, size = 0x4, scoped, tag = 'scoped memory for tpu_custom_call.1']
    %8 = vsyncpa [#allocation3], 0
    // Predicated region
    $region2: #{tpu_custom_call.1} parent=1 // pred_check
      _
    $region3: #{tpu_custom_call.1} parent=1 // pred_check_branch
      %10 = sbr.rel (0) target = $region5
    $region4: #{tpu_custom_call.1} parent=1 // pred_region
      _
    $region5: #{tpu_custom_call.1} parent=1 // pred_fallthru
      _
    // Predicated region
    $region6: #{tpu_custom_call.1} parent=1 // pred_check
      _
    $region7: #{tpu_custom_call.1} parent=1 // pred_check_branch
      %12 = sbr.rel (0) target = $region9
    $region8: #{tpu_custom_call.1} parent=1 // pred_region
      _
    $region9: #{tpu_custom_call.1} parent=1 // pred_fallthru
      _
    // Predicated region
    $region10: #{tpu_custom_call.1} parent=1 // pred_check
      _
    $region11: #{tpu_custom_call.1} parent=1 // pred_check_branch
      %14 = sbr.rel (0) target = $region13
    $region12: #{tpu_custom_call.1} parent=1 // pred_region
      _
    $region13: #{tpu_custom_call.1} parent=1 // pred_fallthru
      _
    %p15 = scmp.eq.s32.totalorder 0, 0
    // Predicated region
    $region14: #{tpu_custom_call.1} parent=1 // pred_check
      %p16 = pneg %p15
    $region15: #{tpu_custom_call.1} parent=1 // pred_check_branch
      %18 = sbr.rel (%p16) target = $region17
    $region16: #{tpu_custom_call.1} parent=1 // pred_region
      %vm19 = vcmask 130048
      %20 = vst.msk [vmem:[#allocation2] sm:$0xff] %vm19, 0.0
      %21 = vst.msk [vmem:[#allocation2 + $0x8] sm:$0xff] %vm19, 0.0
    $region17: #{tpu_custom_call.1} parent=1 // pred_fallthru
      _
    %v22 = vld [vmem:[%s0] sm:$0xff]
    %v23 = vld [vmem:[%s0 + $0x8] sm:$0xff]
    %v24 = vld [vmem:[%s0 + $0x10] sm:$0xff]
    %v25 = vld [vmem:[%s0 + $0x18] sm:$0xff]
    %v26 = vld [vmem:[%s0 + $0x20] sm:$0xff]
    %v27 = vld [vmem:[%s0 + $0x28] sm:$0xff]
    %v28 = vld [vmem:[%s0 + $0x30] sm:$0xff]
    %v29 = vld [vmem:[%s0 + $0x38] sm:$0xff]
    %v30 = vld [vmem:[%s0 + $0x40] sm:$0xff]
    %v31 = vld [vmem:[%s0 + $0x48] sm:$0xff]
    %v32 = vld [vmem:[%s0 + $0x50] sm:$0xff]
    %v33 = vld [vmem:[%s0 + $0x58] sm:$0xff]
    %v34 = vld [vmem:[%s0 + $0x60] sm:$0xff]
    %v35 = vld [vmem:[%s0 + $0x68] sm:$0xff]
    %v36 = vld [vmem:[%s0 + $0x70] sm:$0xff]
    %v37 = vld [vmem:[%s0 + $0x78] sm:$0xff]
    %v38 = vld [vmem:[%s0 + $0x80] sm:$0xff]
    %v39 = vld [vmem:[%s0 + $0x88] sm:$0xff]
    %v40 = vld [vmem:[%s1] sm:$0xff]
    %v41 = vld [vmem:[%s1 + $0x8] sm:$0xff]
    %v42 = vld [vmem:[%s1 + $0x10] sm:$0xff]
    %v43 = vld [vmem:[%s1 + $0x18] sm:$0xff]
    %v44 = vld [vmem:[%s1 + $0x20] sm:$0xff]
    %v45 = vld [vmem:[%s1 + $0x28] sm:$0xff]
    %v46 = vld [vmem:[%s1 + $0x30] sm:$0xff]
    %v47 = vld [vmem:[%s1 + $0x38] sm:$0xff]
    %v48 = vld [vmem:[%s1 + $0x40] sm:$0xff]
    %v49 = vld [vmem:[%s1 + $0x48] sm:$0xff]
    %v50 = vld [vmem:[%s1 + $0x50] sm:$0xff]
    %v51 = vld [vmem:[%s1 + $0x58] sm:$0xff]
    %v52 = vld [vmem:[%s1 + $0x60] sm:$0xff]
    %v53 = vld [vmem:[%s1 + $0x68] sm:$0xff]
    %v54 = vld [vmem:[%s1 + $0x70] sm:$0xff]
    %v55 = vld [vmem:[%s1 + $0x78] sm:$0xff]
    %v56 = vld [vmem:[%s1 + $0x80] sm:$0xff]
    %v57 = vld [vmem:[%s1 + $0x88] sm:$0xff]
    %v58 = vld [vmem:[%s1 + $0x90] sm:$0xff]
    %v59 = vld [vmem:[%s1 + $0x98] sm:$0xff]
    %v60 = vld [vmem:[%s1 + $0xa0] sm:$0xff]
    %v61 = vld [vmem:[%s1 + $0xa8] sm:$0xff]
    %v62 = vld [vmem:[%s1 + $0xb0] sm:$0xff]
    %v63 = vld [vmem:[%s1 + $0xb8] sm:$0xff]
    %v64 = vld [vmem:[%s1 + $0xc0] sm:$0xff]
    %v65 = vld [vmem:[%s1 + $0xc8] sm:$0xff]
    %v66 = vld [vmem:[%s1 + $0xd0] sm:$0xff]
    %vm67 = vcmask 719872
    %v69 = vsel %vm67, %v23, 0
    %v72 = vsel %vm67, %v25, 0
    %v75 = vsel %vm67, %v27, 0
    %v78 = vsel %vm67, %v29, 0
    %v81 = vsel %vm67, %v31, 0
    %v84 = vsel %vm67, %v33, 0
    %v87 = vsel %vm67, %v35, 0
    %v90 = vsel %vm67, %v37, 0
    %v93 = vsel %vm67, %v39, 0
    %95 = vmatprep.subr.mxu0 0.0
    %96 = vmatpush1.msra.mxu0 %v40
    %97 = vmatprep.subr.mxu0 0.0
    %98 = vmatpush1.msra.mxu0 %v41
    %99 = vmatprep.subr.mxu0 0.0
    %100 = vmatpush1.msra.mxu0 %v42
    %101 = vmatprep.subr.mxu0 0.0
    %102 = vmatpush1.msra.mxu0 %v43
    %103 = vmatprep.subr.mxu0 0.0
    %104 = vmatpush1.msra.mxu0 %v44
    %105 = vmatprep.subr.mxu0 0.0
    %106 = vmatpush1.msra.mxu0 %v45
    %107 = vmatprep.subr.mxu0 0.0
    %108 = vmatpush1.msra.mxu0 %v46
    %109 = vmatprep.subr.mxu0 0.0
    %110 = vmatpush1.msra.mxu0 %v47
    %111 = vmatprep.subr.mxu0 0.0
    %112 = vmatpush1.msra.mxu0 %v48
    %113 = vmatprep.subr.mxu0 0.0
    %114 = vmatpush1.msra.mxu0 %v49
    %115 = vmatprep.subr.mxu0 0.0
    %116 = vmatpush1.msra.mxu0 %v50
    %117 = vmatprep.subr.mxu0 0.0
    %118 = vmatpush1.msra.mxu0 %v51
    %119 = vmatprep.subr.mxu0 0.0
    %120 = vmatpush1.msra.mxu0 %v52
    %121 = vmatprep.subr.mxu0 0.0
    %122 = vmatpush1.msra.mxu0 %v53
    %123 = vmatprep.subr.mxu0 0.0
    %124 = vmatpush1.msra.mxu0 %v54
    %125 = vmatprep.subr.mxu0 0.0
    %126 = vmatpush1.msra.mxu0 %v55
    %127 = vmatprep.subr.mxu0 0.0
    %128 = vmatpush1.msra.mxu0 %v56
    %129 = vmatprep.subr.mxu0 0.0
    %130 = vmatpush1.msra.mxu0 %v57
    %131 = vmatprep.subr.mxu0 0.0
    %132 = vmatpush1.msra.mxu0 %v58
    %133 = vmatprep.subr.mxu0 0.0
    %134 = vmatpush1.msra.mxu0 %v59
    %135 = vmatprep.subr.mxu0 0.0
    %136 = vmatpush1.msra.mxu0 %v60
    %137 = vmatprep.subr.mxu0 0.0
    %138 = vmatpush1.msra.mxu0 %v61
    %139 = vmatprep.subr.mxu0 0.0
    %140 = vmatpush1.msra.mxu0 %v62
    %141 = vmatprep.subr.mxu0 0.0
    %142 = vmatpush1.msra.mxu0 %v63
    %143 = vmatprep.subr.mxu0 0.0
    %144 = vmatpush1.msra.mxu0 %v64
    %145 = vmatprep.subr.mxu0 0.0
    %146 = vmatpush1.msra.mxu0 %v65
    %147 = vmatprep.subr.mxu0 0.0
    %148 = vmatpush1.msra.mxu0 %v66
    %149 = vmatprep.subr.mxu0 0.0
    %150 = vmatpush1.msra.mxu0 0.0
    %151 = vmatprep.subr.mxu0 0.0
    %152 = vmatpush1.msra.mxu0 0.0
    %153 = vmatprep.subr.mxu0 0.0
    %154 = vmatpush1.msra.mxu0 0.0
    %155 = vmatprep.subr.mxu0 0.0
    %156 = vmatpush1.msra.mxu0 0.0
    %157 = vmatprep.subr.mxu0 0.0
    %158 = vmatpush1.msra.mxu0 0.0
    %159 = vmatprep.mubr.f32.mxu0 %v69
    %160 = vmatmul.mubr.f32.gmra.mrb[0].mxu0 %v22
    %v161 = vpop.f32.mrb[0].mxu0
    %v162 = vadd.f32 0.0, %v161
    %v163 = vpop.f32.mrb[0].mxu0
    %164 = vmatprep.mubr.f32.mxu0 %v72
    %165 = vmatmul.mubr.f32.gmra.mrb[0].mxu0 %v24
    %v166 = vpop.f32.mrb[0].mxu0
    %v167 = vadd.f32 0.0, %v166
    %v168 = vpop.f32.mrb[0].mxu0
    %169 = vmatprep.mubr.f32.mxu0 %v75
    %170 = vmatmul.mubr.f32.gmra.mrb[0].mxu0 %v26
    %v171 = vpop.f32.mrb[0].mxu0
    %v172 = vadd.f32 0.0, %v171
    %v173 = vpop.f32.mrb[0].mxu0
    %174 = vmatprep.mubr.f32.mxu0 %v78
    %175 = vmatmul.mubr.f32.gmra.mrb[0].mxu0 %v28
    %v176 = vpop.f32.mrb[0].mxu0
    %v177 = vadd.f32 0.0, %v176
    %v178 = vpop.f32.mrb[0].mxu0
    %179 = vmatprep.mubr.f32.mxu0 %v81
    %180 = vmatmul.mubr.f32.gmra.mrb[0].mxu0 %v30
    %v181 = vpop.f32.mrb[0].mxu0
    %v182 = vadd.f32 0.0, %v181
    %v183 = vpop.f32.mrb[0].mxu0
    %184 = vmatprep.mubr.f32.mxu0 %v84
    %185 = vmatmul.mubr.f32.gmra.mrb[0].mxu0 %v32
    %v186 = vpop.f32.mrb[0].mxu0
    %v187 = vadd.f32 0.0, %v186
    %v188 = vpop.f32.mrb[0].mxu0
    %189 = vmatprep.mubr.f32.mxu0 %v87
    %190 = vmatmul.mubr.f32.gmra.mrb[0].mxu0 %v34
    %v191 = vpop.f32.mrb[0].mxu0
    %v192 = vadd.f32 0.0, %v191
    %v193 = vpop.f32.mrb[0].mxu0
    %194 = vmatprep.mubr.f32.mxu0 %v90
    %195 = vmatmul.mubr.f32.gmra.mrb[0].mxu0 %v36
    %v196 = vpop.f32.mrb[0].mxu0
    %v197 = vadd.f32 0.0, %v196
    %v198 = vpop.f32.mrb[0].mxu0
    %199 = vmatprep.mubr.f32.mxu0 %v93
    %200 = vmatmul.mubr.f32.gmra.mrb[0].mxu0 %v38
    %v201 = vpop.f32.mrb[0].mxu0
    %v202 = vadd.f32 0.0, %v201
    %v203 = vpop.f32.mrb[0].mxu0
    %204 = vdwg.mxu0
    %s205 = smul.u32 0, 72
    %v206 = vlaneseq
    %v207 = vshrl.u32 %v206, 7
    %v208 = vadd.s32 %v207, 8
    %v209 = vadd.s32 %v207, 16
    %v210 = vadd.s32 %v207, 24
    %v211 = vadd.s32 %v207, 32
    %v212 = vadd.s32 %v207, 40
    %v213 = vadd.s32 %v207, 48
    %v214 = vadd.s32 %v207, 56
    %v215 = vadd.s32 %v207, 64
    %v216 = vstv %s205
    %v217 = vadd.s32 %v216, %v207
    %v218 = vadd.s32 %v216, %v208
    %v219 = vadd.s32 %v216, %v209
    %v220 = vadd.s32 %v216, %v210
    %v221 = vadd.s32 %v216, %v211
    %v222 = vadd.s32 %v216, %v212
    %v223 = vadd.s32 %v216, %v213
    %v224 = vadd.s32 %v216, %v214
    %v225 = vadd.s32 %v216, %v215
    %vm226 = vcmp.lt.s32.totalorder %v217, 72
    %vm227 = vcmp.lt.s32.totalorder %v218, 72
    %vm228 = vcmp.lt.s32.totalorder %v219, 72
    %vm229 = vcmp.lt.s32.totalorder %v220, 72
    %vm230 = vcmp.lt.s32.totalorder %v221, 72
    %vm231 = vcmp.lt.s32.totalorder %v222, 72
    %vm232 = vcmp.lt.s32.totalorder %v223, 72
    %vm233 = vcmp.lt.s32.totalorder %v224, 72
    %vm234 = vcmp.lt.s32.totalorder %v225, 72
    %v235 = vsel %vm226, %v162, 0.0
    %v236 = vsel %vm227, %v167, 0.0
    %v237 = vsel %vm228, %v172, 0.0
    %v238 = vsel %vm229, %v177, 0.0
    %v239 = vsel %vm230, %v182, 0.0
    %v240 = vsel %vm231, %v187, 0.0
    %v241 = vsel %vm232, %v192, 0.0
    %v242 = vsel %vm233, %v197, 0.0
    %v243 = vsel %vm234, %v202, 0.0
    %v244 = vld [vmem:[#allocation2] sm:$0xff]
    %v245 = vld [vmem:[#allocation2 + $0x8] sm:$0xff]
    %v246 = vld [vmem:[%s2] sm:$0xff]
    %v247 = vld [vmem:[%s2 + $0x8] sm:$0xff]
    %vm248 = vcmask 588800
    %v250 = vsel %vm248, %v246, 0
    %v253 = vsel %vm248, %v247, 0
    %255 = vmatprep.subr.mxu0 0.0
    %256 = vmatpush1.msra.mxu0 %v235
    %257 = vmatprep.subr.mxu0 0.0
    %258 = vmatpush1.msra.mxu0 %v236
    %259 = vmatprep.subr.mxu0 0.0
    %260 = vmatpush1.msra.mxu0 %v237
    %261 = vmatprep.subr.mxu0 0.0
    %262 = vmatpush1.msra.mxu0 %v238
    %263 = vmatprep.subr.mxu0 0.0
    %264 = vmatpush1.msra.mxu0 %v239
    %265 = vmatprep.subr.mxu0 0.0
    %266 = vmatpush1.msra.mxu0 %v240
    %267 = vmatprep.subr.mxu0 0.0
    %268 = vmatpush1.msra.mxu0 %v241
    %269 = vmatprep.subr.mxu0 0.0
    %270 = vmatpush1.msra.mxu0 %v242
    %271 = vmatprep.subr.mxu0 0.0
    %272 = vmatpush1.msra.mxu0 %v243
    %273 = vmatprep.subr.mxu0 0.0
    %274 = vmatpush1.msra.mxu0 0.0
    %275 = vmatprep.subr.mxu0 0.0
    %276 = vmatpush1.msra.mxu0 0.0
    %277 = vmatprep.subr.mxu0 0.0
    %278 = vmatpush1.msra.mxu0 0.0
    %279 = vmatprep.subr.mxu0 0.0
    %280 = vmatpush1.msra.mxu0 0.0
    %281 = vmatprep.subr.mxu0 0.0
    %282 = vmatpush1.msra.mxu0 0.0
    %283 = vmatprep.subr.mxu0 0.0
    %284 = vmatpush1.msra.mxu0 0.0
    %285 = vmatprep.subr.mxu0 0.0
    %286 = vmatpush1.msra.mxu0 0.0
    %287 = vmatprep.subr.mxu0 0.0
    %288 = vmatpush1.msra.mxu0 0.0
    %289 = vmatprep.subr.mxu0 0.0
    %290 = vmatpush1.msra.mxu0 0.0
    %291 = vmatprep.subr.mxu0 0.0
    %292 = vmatpush1.msra.mxu0 0.0
    %293 = vmatprep.subr.mxu0 0.0
    %294 = vmatpush1.msra.mxu0 0.0
    %295 = vmatprep.subr.mxu0 0.0
    %296 = vmatpush1.msra.mxu0 0.0
    %297 = vmatprep.subr.mxu0 0.0
    %298 = vmatpush1.msra.mxu0 0.0
    %299 = vmatprep.subr.mxu0 0.0
    %300 = vmatpush1.msra.mxu0 0.0
    %301 = vmatprep.subr.mxu0 0.0
    %302 = vmatpush1.msra.mxu0 0.0
    %303 = vmatprep.subr.mxu0 0.0
    %304 = vmatpush1.msra.mxu0 0.0
    %305 = vmatprep.subr.mxu0 0.0
    %306 = vmatpush1.msra.mxu0 0.0
    %307 = vmatprep.subr.mxu0 0.0
    %308 = vmatpush1.msra.mxu0 0.0
    %309 = vmatprep.subr.mxu0 0.0
    %310 = vmatpush1.msra.mxu0 0.0
    %311 = vmatprep.subr.mxu0 0.0
    %312 = vmatpush1.msra.mxu0 0.0
    %313 = vmatprep.subr.mxu0 0.0
    %314 = vmatpush1.msra.mxu0 0.0
    %315 = vmatprep.subr.mxu0 0.0
    %316 = vmatpush1.msra.mxu0 0.0
    %317 = vmatprep.subr.mxu0 0.0
    %318 = vmatpush1.msra.mxu0 0.0
    %319 = vmatprep.mubr.f32.mxu0 0.0
    %320 = vmatmul.mubr.f32.gmra.mrb[0].mxu0 %v250
    %v321 = vpop.f32.mrb[0].mxu0
    %v322 = vadd.f32 0.0, %v321
    %v323 = vpop.f32.mrb[0].mxu0
    %324 = vmatprep.mubr.f32.mxu0 0.0
    %325 = vmatmul.mubr.f32.gmra.mrb[0].mxu0 %v253
    %v326 = vpop.f32.mrb[0].mxu0
    %v327 = vadd.f32 0.0, %v326
    %v328 = vpop.f32.mrb[0].mxu0
    %329 = vdwg.mxu0
    %v330 = vadd.f32 %v244, %v322
    %v331 = vadd.f32 %v245, %v327
    %vm332 = vcmask 130048
    %333 = vst.msk [vmem:[#allocation2] sm:$0xff] %vm332, %v330
    %334 = vst.msk [vmem:[#allocation2 + $0x8] sm:$0xff] %vm332, %v331
    // Predicated region
    $region18: #{tpu_custom_call.1} parent=1 // pred_check
      _
    $region19: #{tpu_custom_call.1} parent=1 // pred_check_branch
      %336 = sbr.rel (0) target = $region21
    $region20: #{tpu_custom_call.1} parent=1 // pred_region
      %s338 = ssub.s32 256, 256
      %339 = vsyncadd [#allocation3], %s338
      %s340 = sshll.u32 [#allocation2], 4
      %s341 = int_to_ptr.vmem [resolvable:$true] %s340
      %346 = dma.vmem_to_hbm [thread:$0]  %s341, 256, %s3, [#allocation3], 128, 128, 8
    $region21: #{tpu_custom_call.1} parent=1 // pred_fallthru
      _
    // Predicated region
    $region22: #{tpu_custom_call.1} parent=1 // pred_check
      _
    $region23: #{tpu_custom_call.1} parent=1 // pred_check_branch
      %348 = sbr.rel (0) target = $region25
    $region24: #{tpu_custom_call.1} parent=1 // pred_region
      %349 = dma.done [#allocation3], 256
    $region25: #{tpu_custom_call.1} parent=1 // pred_fallthru
      _
    %350 = vsyncpa [#allocation3], 1

</llo_original>
